<compile_context>
chip_gen: v5e
topology: v5e:2x2
jax: 0.10.0
libtpu: 0.0.40
codegen_flags: <defaults>
</compile_context>

<pallas_src>
import functools
import math

import jax
import jax.numpy as jnp
from jax.experimental import pallas as pl
from jax.experimental.pallas import tpu as pltpu


# ---------------------------------------------------------------------------
# VMEM budgeting (per generation, double-buffering aware).
# ---------------------------------------------------------------------------
def _vmem_budget():
    """Returns (per-step in+out block budget, vmem_limit_bytes)."""
    try:
        cap = int(getattr(pltpu.get_tpu_info(), "vmem_capacity_bytes", 128 << 20))
    except Exception:  # no info at trace time -> assume the smallest (v7x: 64 MiB)
        cap = 64 << 20
    # BlockSpec double-buffers every operand: real footprint ~= 2 * (in + out),
    # plus in-kernel temporaries.  Keep the block budget well under cap.
    block_budget = min(8 << 20, max(512 << 10, cap // 12))
    vmem_limit = min(int(cap * 0.7), max(32 << 20, 6 * block_budget))
    return block_budget, vmem_limit


# ---------------------------------------------------------------------------
# NHWC-native kernel: pure copy, no transposes anywhere.
# ---------------------------------------------------------------------------
def _s2d_nhwc_kernel(x_ref, o_ref, *, scale: int, group: int, aligned: bool):
    """x_ref: (1, R, s, W_out, s*C)   o_ref: (1, R, W_out, s*s*C)."""
    if aligned:
        # group % 128 == 0: every sub-store is an unmasked, lane-dense slab copy.
        for i in range(scale):
            o_ref[:, :, :, i * group:(i + 1) * group] = x_ref[:, :, i, :, :]
    else:
        # Assemble the full out_c-wide rows in registers and issue a single
        # lane-dense store (avoids vst.msk partial stores when s*C % 128 != 0).
        o_ref[...] = jnp.concatenate(
            [x_ref[:, :, i, :, :] for i in range(scale)], axis=-1)


def concat_downsample2d_nhwc(x_nhwc: jax.Array, scale_factor: int) -> jax.Array:
    """Space-to-depth on an NHWC tensor (zero layout transposes)."""
    n, h, w, c = x_nhwc.shape
    s = int(scale_factor)
    if h % s != 0 or w % s != 0:
        raise AssertionError("spatial size should be divisible by scale_factor")
    if s == 1:
        return x_nhwc
    h_out, w_out = h // s, w // s
    group = s * c                      # channels contributed by one input row
    out_c = s * s * c
    itemsize = jnp.dtype(x_nhwc.dtype).itemsize

    # Free regrouping (row-major, no copy): (N,H,W,C) -> (N,H_out,s,W_out,s*C).
    x5 = x_nhwc.reshape(n, h_out, s, w_out, group)

    block_budget, vmem_limit = _vmem_budget()
    bytes_per_row = 2 * w_out * out_c * itemsize        # in slab + out slab per row
    cap_rows = max(1, min(h_out, block_budget // max(1, bytes_per_row)))
    # Keep >= ~4 grid steps so both v7x TensorCores get work even at N=1.
    r_tile = max(1, min(cap_rows, pl.cdiv(h_out, pl.cdiv(4, n))))
    grid = (n, pl.cdiv(h_out, r_tile))   # ragged last tile is on a non-trailing dim

    kernel = functools.partial(_s2d_nhwc_kernel, scale=s, group=group,
                               aligned=(group % 128 == 0))
    return pl.pallas_call(
        kernel,
        out_shape=jax.ShapeDtypeStruct((n, h_out, w_out, out_c), x_nhwc.dtype),
        grid=grid,
        in_specs=[pl.BlockSpec((1, r_tile, s, w_out, group),
                               lambda b, t: (b, t, 0, 0, 0))],
        out_specs=pl.BlockSpec((1, r_tile, w_out, out_c),
                               lambda b, t: (b, t, 0, 0)),
        compiler_params=pltpu.CompilerParams(
            dimension_semantics=("parallel", "parallel"),
            vmem_limit_bytes=vmem_limit,
        ),
        cost_estimate=pl.CostEstimate(
            flops=0, transcendentals=0,
            bytes_accessed=2 * x_nhwc.size * itemsize),
    )(x5)


# ---------------------------------------------------------------------------
# NCHW-output kernel: output permutation folded into out_spec, so the NCHW
# wrapper needs only ONE XLA transpose (on the input).
# ---------------------------------------------------------------------------
def _s2d_to_nchw_kernel(x_ref, o_ref):
    """x_ref: (1, R, 1, W_out, s*C)   o_ref: (1, s*C, R*W_out) (NCHW block)."""
    _, r, _, w, g = x_ref.shape
    # Free merge (minor dim g unchanged; W_out is sublane-aligned by the gate),
    # then a single minor-2D transpose (XLU, otherwise idle in this copy kernel)
    # and one lane-dense store.
    v = x_ref[...].reshape(r * w, g)
    o_ref[...] = v.T.reshape(1, g, r * w)


def _fused_nchw_row_tile(h_out, w_out, group, itemsize, block_budget):
    """Row tile for the NCHW-output kernel, or None if no valid tiling exists."""
    bytes_per_row = 2 * w_out * group * itemsize        # in block + out block per row
    cap_rows = max(1, block_budget // max(1, bytes_per_row))
    if cap_rows >= h_out:
        return h_out                                     # out minor dim == full H*W
    # Tiled case: the out block's minor extent r_tile*W_out must be a multiple of
    # 128, and we keep h_out % r_tile == 0 so no ragged block lands on a trailing dim.
    q = 128 // math.gcd(w_out, 128)
    for d in range(min(cap_rows, h_out), 0, -1):
        if h_out % d == 0 and d % q == 0:
            return d
    return None


def concat_downsample2d(x_nchw: jax.Array, scale_factor: int) -> jax.Array:
    """Pallas implementation matching holocron's F.concat_downsample2d (NCHW)."""
    n, c, h, w = x_nchw.shape
    s = int(scale_factor)
    if h % s != 0 or w % s != 0:
        raise AssertionError("spatial size should be divisible by scale_factor")
    if s == 1:
        return x_nchw
    h_out, w_out = h // s, w // s
    group = s * c
    out_c = s * s * c
    itemsize = jnp.dtype(x_nchw.dtype).itemsize
    sub = max(8, 32 // itemsize)          # sublane multiple for this dtype

    # One XLA transpose puts channels on lanes; the output-side permutation is
    # folded into the kernel below, so at most one full-tensor transpose remains.
    # TODO(synk): drop this last transpose too via an in-kernel stride-s lane
    # de-interleave reading NCHW directly (needs XLU shuffle work).
    x_nhwc = jnp.transpose(x_nchw, (0, 2, 3, 1))

    block_budget, vmem_limit = _vmem_budget()
    fused_ok = (w_out % sub == 0) and (group % sub == 0)
    r_tile = (_fused_nchw_row_tile(h_out, w_out, group, itemsize,
                                   block_budget // 2) if fused_ok else None)
    if r_tile is None:
        # Always-valid fallback: pure-copy NHWC kernel + XLA output transpose.
        out_nhwc = concat_downsample2d_nhwc(x_nhwc, s)
        return jnp.transpose(out_nhwc, (0, 3, 1, 2))

    x5 = x_nhwc.reshape(n, h_out, s, w_out, group)       # free regroup
    out_flat = pl.pallas_call(
        _s2d_to_nchw_kernel,
        out_shape=jax.ShapeDtypeStruct((n, out_c, h_out * w_out), x_nchw.dtype),
        grid=(n, s, h_out // r_tile),
        in_specs=[pl.BlockSpec((1, r_tile, 1, w_out, group),
                               lambda b, i, t: (b, t, i, 0, 0))],
        out_specs=pl.BlockSpec((1, group, r_tile * w_out),
                               lambda b, i, t: (b, i, t)),
        compiler_params=pltpu.CompilerParams(
            dimension_semantics=("parallel", "parallel", "parallel"),
            vmem_limit_bytes=vmem_limit,
        ),
        cost_estimate=pl.CostEstimate(
            flops=0, transcendentals=0,
            bytes_accessed=2 * x_nchw.size * itemsize),
    )(x5)
    # Layout-preserving (free) reshape back to NCHW.
    return out_flat.reshape(n, out_c, h_out, w_out)


# ---------------------------------------------------------------------------
# Pure-jnp reference (mirrors the PyTorch view + permute + flatten).
# ---------------------------------------------------------------------------
def _reference(x, s):
    n, c, h, w = x.shape
    out = x.reshape(n, c, h // s, s, w // s, s)
    out = jnp.transpose(out, (0, 3, 5, 1, 2, 4))
    return out.reshape(n, s * s * c, h // s, w // s)


if __name__ == "__main__":
    key = jax.random.PRNGKey(0)
    cases = [
        # (n, c, h, w, scale)
        (2, 4, 16, 16, 2),   # NCHW path: fused NCHW-output kernel (single transpose)
        (2, 4, 16, 16, 4),   # NCHW path: alignment gate fails -> fallback path
        (1, 4, 20, 20, 2),   # ragged row tiling (h_out % r_tile != 0) on NHWC kernel
        (1, 64, 16, 16, 2),  # YOLO-like channels: lane-aligned group = 128
    ]
    for idx, (n, c, h, w, s) in enumerate(cases):
        x = jax.random.normal(jax.random.fold_in(key, idx), (n, c, h, w),
                              dtype=jnp.float32)
        ref = _reference(x, s)

        out = jax.block_until_ready(concat_downsample2d(x, s))
        assert out.shape == (n, c * s * s, h // s, w // s), out.shape
        assert out.dtype == x.dtype
        assert jnp.array_equal(out, ref), f"NCHW mismatch for case {(n, c, h, w, s)}"

        # Zero-transpose NHWC entry point must match as well.
        x_nhwc = jnp.transpose(x, (0, 2, 3, 1))
        out_nhwc = jax.block_until_ready(concat_downsample2d_nhwc(x_nhwc, s))
        ref_nhwc = jnp.transpose(ref, (0, 2, 3, 1))
        assert jnp.array_equal(out_nhwc, ref_nhwc), \
            f"NHWC mismatch for case {(n, c, h, w, s)}"

    print("KERNEL_OK")
</pallas_src>

<mosaic_0001>
module attributes {stable_mosaic.version = 11 : i64} {
  func.func @_s2d_to_nchw_kernel(%arg0: i32, %arg1: i32, %arg2: i32, %arg3: memref<1x8x1x8x8xf32, #tpu.memory_space<vmem>>, %arg4: memref<1x8x64xf32, #tpu.memory_space<vmem>>) attributes {dimension_semantics = [#tpu.dimension_semantics<parallel>, #tpu.dimension_semantics<parallel>, #tpu.dimension_semantics<parallel>], iteration_bounds = array<i64: 2, 2, 1>, scalar_prefetch = 0 : i64, scratch_operands = 0 : i64, tpu.core_type = #tpu.core_type<tc>, window_params = [{transform_indices = @transform_0, window_bounds = array<i64: 1, 8, 1, 8, 8>}, {transform_indices = @transform_1, window_bounds = array<i64: 1, 8, 64>}]} {
    %c0 = arith.constant 0 : index
    %c0_0 = arith.constant 0 : index
    %c0_1 = arith.constant 0 : index
    %c0_2 = arith.constant 0 : index
    %c0_3 = arith.constant 0 : index
    %0 = vector.load %arg3[%c0, %c0_0, %c0_1, %c0_2, %c0_3] : memref<1x8x1x8x8xf32, #tpu.memory_space<vmem>>, vector<1x8x1x8x8xf32>
    %1 = vector.shape_cast %0 : vector<1x8x1x8x8xf32> to vector<64x8xf32>
    %2 = tpu.transpose %1, [1, 0] : vector<64x8xf32> -> vector<8x64xf32>
    %3 = vector.shape_cast %2 : vector<8x64xf32> to vector<1x8x64xf32>
    %c0_4 = arith.constant 0 : index
    %c0_5 = arith.constant 0 : index
    %c0_6 = arith.constant 0 : index
    %4 = vector.load %arg4[%c0_4, %c0_5, %c0_6] : memref<1x8x64xf32, #tpu.memory_space<vmem>>, vector<1x8x64xf32>
    tpu.vector_store %arg4[%c0_4, %c0_5, %c0_6], %3 {strides = array<i32>} : memref<1x8x64xf32, #tpu.memory_space<vmem>>, vector<1x8x64xf32>,
    return
  }
  func.func @transform_0(%arg0: i32, %arg1: i32, %arg2: i32) -> (i32, i32, i32, i32, i32) {
    %c0_i32 = arith.constant 0 : i32
    %c0_i32_0 = arith.constant 0 : i32
    %c0_i32_1 = arith.constant 0 : i32
    return %arg0, %arg2, %arg1, %c0_i32, %c0_i32_0 : i32, i32, i32, i32, i32
  }
  func.func @transform_1(%arg0: i32, %arg1: i32, %arg2: i32) -> (i32, i32, i32) {
    %c0_i32 = arith.constant 0 : i32
    return %arg0, %arg1, %arg2 : i32, i32, i32
  }
}

</mosaic_0001>

<llo_original>
// kernel: tpu_custom_call.1
$region0: #{tpu_custom_call.1}
  #allocation0 [shape = 'u32[]', space=smem, size = 0x4, offset = 0x4, fixed_abs, tag = 'smem constant byte address 0x4 - core index']
  #allocation1 [shape = 'u32[72,128]{1,0:T(1,128)}', space=vmem, size = 0x9000, scoped, tag = 'internal scratch']
  %s0 = inlined_call_operand.hbm [shape: f32[2,8,2,8,8], index: 0, kind: input, shape index: {}]
  %s1 = inlined_call_operand.hbm [shape: f32[2,16,64], index: 1, kind: output, shape index: {}]
  %s2 = sld [smem:[#allocation0]]
  $region41: #{tpu_custom_call.1} parent=0
    _
  %s4 = ssub.s32 1, %s2
  %s5 = scalar_select 0, %s4, %s2
  $region1: #{tpu_custom_call.1} parent=0
    #allocation2 [shape = 'u8[65536]{0}', space=vmem, size = 0x10000, scoped, tag = 'input window, operand 0']
    #allocation3 [shape = 's32[2]{0}', space=sflag, size = 0x8, scoped, tag = 'scoped memory for tpu_custom_call.1']
    #allocation4 [shape = 's32[2]{0}', space=sflag, size = 0x8, scoped, tag = 'scoped memory for tpu_custom_call.1']
    #allocation5 [shape = 'u8[8192]{0}', space=vmem, size = 0x2000, scoped, tag = 'output window, operand 0']
    %6 = vsyncpa [#allocation3], 0
    %s7 = scalar_lea.sflag [#allocation3], 1
    %8 = vsyncpa %s7, 0
    %9 = vsyncpa [#allocation4], 0
    %s10 = scalar_lea.sflag [#allocation4], 1
    %11 = vsyncpa %s10, 0
    loop: start=0, step=1, limit=6
    $region2: #{tpu_custom_call.1} parent=1 // loop_pre_header
      _
    $region3: #{tpu_custom_call.1} parent=1 // loop_header
      %s13 = sphi 0, %s17
      %p14 = scmp.ge.s32.totalorder %s13, 6
      %s20 = sphi 0, %s39
      %s21 = sphi 0, %s35
      %s22 = sphi 0, %s31
      %s23 = sphi 0, %s20
      %s24 = sphi 0, %s21
      %s25 = sphi 0, %s22
      %s26 = sphi 0, %s23
      %s27 = sphi 0, %s24
      %s28 = sphi 0, %s25
      %s46 = sphi 0, %s48
      %s49 = sphi 0, %s46
      %s50 = sphi 0, %s49
      %s66 = sphi 0, %s50
      %s76 = sphi 0, %s78
      %s79 = sphi 0, %s76
      %s80 = sphi 0, %s79
      %s96 = sphi 0, %s80
    $region4: #{tpu_custom_call.1} parent=1 // loop_header_branch
      %16 = sbr.rel (%p14) target = $region8
    $region5: #{tpu_custom_call.1} parent=1 // loop_body
      %s18 = ssub.s32 %s13, 1
      %s19 = ssub.s32 %s13, 2
      %s29 = sadd.s32 1, %s22
      %p30 = scmp.ge.s32.totalorder %s29, 1
      %s31 = scalar_select %p30, 0, %s29
      %s32 = sadd.s32 1, %s21
      %s33 = scalar_select %p30, %s32, %s21
      %p34 = scmp.ge.s32.totalorder %s33, 2
      %s35 = scalar_select %p34, 0, %s33
      %s36 = sadd.s32 1, %s20
      %s37 = scalar_select %p34, %s36, %s20
      %p38 = scmp.ge.s32.totalorder %s37, 2
      %s39 = scalar_select %p38, 0, %s37
      %s40 = ssub.s32 %s20, %s39
      %s41 = ssub.s32 %s22, %s31
      %s42 = sor.u32 %s40, %s41
      %s43 = ssub.s32 %s21, %s35
      %s44 = sor.u32 %s42, %s43
      %p45 = scmp.eq.s32.totalorder %s44, 0
      %s47 = sadd.s32 %s46, 1
      %s48 = scalar_select %p45, %s46, %s47
      %p51 = pneg %p45
      %p52 = scmp.eq.s32.totalorder %s13, 3
      %p53 = por %p51, %p52
      %p54 = scmp.ne.s32.totalorder %s46, %s49
      %p55 = scmp.eq.s32.totalorder %s13, 0
      %p56 = por %p54, %p55
      %p57 = scmp.ne.s32.totalorder %s46, %s49
      %p58 = scmp.eq.s32.totalorder %s18, 3
      %p59 = por %p57, %p58
      %p60 = scmp.ne.s32.totalorder %s49, %s50
      %p61 = scmp.eq.s32.totalorder %s18, 0
      %p62 = por %p60, %p61
      %p63 = scmp.ne.s32.totalorder %s49, %s50
      %p64 = scmp.eq.s32.totalorder %s19, 3
      %p65 = por %p63, %p64
      %p67 = scmp.ne.s32.totalorder %s50, %s66
      %p68 = scmp.eq.s32.totalorder %s19, 0
      %p69 = por %p67, %p68
      %s70 = ssub.s32 %s20, %s39
      %s71 = ssub.s32 %s21, %s35
      %s72 = sor.u32 %s70, %s71
      %s73 = ssub.s32 %s22, %s31
      %s74 = sor.u32 %s72, %s73
      %p75 = scmp.eq.s32.totalorder %s74, 0
      %s77 = sadd.s32 %s76, 1
      %s78 = scalar_select %p75, %s76, %s77
      %p81 = pneg %p75
      %p82 = scmp.eq.s32.totalorder %s13, 3
      %p83 = por %p81, %p82
      %p84 = scmp.ne.s32.totalorder %s76, %s79
      %p85 = scmp.eq.s32.totalorder %s13, 0
      %p86 = por %p84, %p85
      %p87 = scmp.ne.s32.totalorder %s76, %s79
      %p88 = scmp.eq.s32.totalorder %s18, 3
      %p89 = por %p87, %p88
      %p90 = scmp.ne.s32.totalorder %s79, %s80
      %p91 = scmp.eq.s32.totalorder %s18, 0
      %p92 = por %p90, %p91
      %p93 = scmp.ne.s32.totalorder %s79, %s80
      %p94 = scmp.eq.s32.totalorder %s19, 3
      %p95 = por %p93, %p94
      %p97 = scmp.ne.s32.totalorder %s80, %s96
      %p98 = scmp.eq.s32.totalorder %s19, 0
      %p99 = por %p97, %p98
      %p100 = scmp.le.s32.totalorder 1, %s13
      %p101 = scmp.lt.s32.totalorder %s13, 5
      %p102 = pnand %p100, %p101
      %p103 = pneg %p102
      // Predicated region
      $region9: #{tpu_custom_call.1} parent=5 // pred_check
        _
      $region10: #{tpu_custom_call.1} parent=5 // pred_check_branch
        %105 = sbr.rel (%p102) target = $region12
      $region11: #{tpu_custom_call.1} parent=5 // pred_region
        %s106 = ssub.s32 %s13, 1
      $region12: #{tpu_custom_call.1} parent=5 // pred_fallthru
        _
      %p107 = scmp.lt.s32.totalorder %s13, 4
      // Predicated region
      $region13: #{tpu_custom_call.1} parent=5 // pred_check
        %p108 = pneg %p107
      $region14: #{tpu_custom_call.1} parent=5 // pred_check_branch
        %110 = sbr.rel (%p108) target = $region16
      $region15: #{tpu_custom_call.1} parent=5 // pred_region
        // Predicated region
        $region17: #{tpu_custom_call.1} parent=15 // pred_check
          %p111 = pneg %p56
        $region18: #{tpu_custom_call.1} parent=15 // pred_check_branch
          %113 = sbr.rel (%p111) target = $region20
        $region19: #{tpu_custom_call.1} parent=15 // pred_region
          %s114 = sand.u32 %s46, 1
          %s115 = scalar_lea.sflag [#allocation3], %s114
          %s116 = sand.u32 %s46, 1
          %s117 = smul.addr %s116, 64
          %s118 = scalar_lea.vmem [#allocation2], %s117
          %s119 = smul.u32 8, %s22
          %121 = vsyncadd %s115, 0
          %s122 = smul.addr %s119, 2
          %s123 = sadd.s32 %s21, %s122
          %s124 = smul.addr %s20, 16
          %s125 = sadd.s32 %s123, %s124
          %s126 = smul.addr %s125, 8
          %s127 = scalar_lea.hbm %s0, %s126
          %s128 = sshll.u32 %s127, 4
          %s129 = int_to_ptr.hbm [resolvable:$true] %s128
          %s130 = sshll.u32 %s118, 4
          %s131 = int_to_ptr.vmem [resolvable:$true] %s130
          %136 = dma.hbm_to_vmem [thread:$0]  %s129, 1024, %s131, %s115, 256, 128, 8
        $region20: #{tpu_custom_call.1} parent=15 // pred_fallthru
          _
      $region16: #{tpu_custom_call.1} parent=5 // pred_fallthru
        _
      %p137 = scmp.le.s32.totalorder 1, %s13
      %p138 = scmp.lt.s32.totalorder %s13, 5
      %p139 = pnand %p137, %p138
      %p140 = pneg %p139
      // Predicated region
      $region21: #{tpu_custom_call.1} parent=5 // pred_check
        _
      $region22: #{tpu_custom_call.1} parent=5 // pred_check_branch
        %142 = sbr.rel (%p139) target = $region24
      $region23: #{tpu_custom_call.1} parent=5 // pred_region
        %s143 = ssub.s32 %s13, 1
        %s144 = sand.u32 %s49, 1
        %s145 = scalar_lea.sflag [#allocation3], %s144
        %s146 = sand.u32 %s49, 1
        %s147 = smul.addr %s146, 64
        %s148 = scalar_lea.vmem [#allocation2], %s147
        // Predicated region
        $region25: #{tpu_custom_call.1} parent=23 // pred_check
          %p149 = pneg %p62
        $region26: #{tpu_custom_call.1} parent=23 // pred_check_branch
          %151 = sbr.rel (%p149) target = $region28
        $region27: #{tpu_custom_call.1} parent=23 // pred_region
          %153 = dma.done %s145, 1024
        $region28: #{tpu_custom_call.1} parent=23 // pred_fallthru
          _
        %s154 = sand.u32 %s49, 1
        %s155 = scalar_lea.sflag [#allocation3], %s154
        %s156 = sand.u32 %s49, 1
        %s157 = smul.addr %s156, 64
        %s158 = scalar_lea.vmem [#allocation2], %s157
        %p159 = pneg %p62
        %p160 = pneg %p59
        %p161 = pneg %p92
        %p162 = pneg %p89
        %s163 = sand.u32 %s79, 1
        %s164 = scalar_lea.sflag [#allocation4], %s163
        %s165 = sand.u32 %s79, 1
        %s166 = smul.addr %s165, 8
        %s167 = scalar_lea.vmem [#allocation5], %s166
        %s168 = smul.u32 8, %s25
        %v169 = vld [vmem:[%s148] sm:$0xff]
        %v170 = vld [vmem:[%s148 + $0x8] sm:$0xff]
        %v171 = vld [vmem:[%s148 + $0x10] sm:$0xff]
        %v172 = vld [vmem:[%s148 + $0x18] sm:$0xff]
        %v173 = vld [vmem:[%s148 + $0x20] sm:$0xff]
        %v174 = vld [vmem:[%s148 + $0x28] sm:$0xff]
        %v175 = vld [vmem:[%s148 + $0x30] sm:$0xff]
        %v176 = vld [vmem:[%s148 + $0x38] sm:$0xff]
        %177 = vxpose.xlu0.b32.start [1/16] %v169, 128
        %178 = vxpose.xlu0.b32.cont [2/16] %v170, 128
        %179 = vxpose.xlu0.b32.cont [3/16] %v171, 128
        %180 = vxpose.xlu0.b32.cont [4/16] %v172, 128
        %181 = vxpose.xlu0.b32.cont [5/16] %v173, 128
        %182 = vxpose.xlu0.b32.cont [6/16] %v174, 128
        %183 = vxpose.xlu0.b32.cont [7/16] %v175, 128
        %184 = vxpose.xlu0.b32.cont [8/16] %v176, 128
        %185 = vxpose.xlu0.b32.cont [9/16] 0.0, 128
        %186 = vxpose.xlu0.b32.cont [10/16] 0.0, 128
        %187 = vxpose.xlu0.b32.cont [11/16] 0.0, 128
        %188 = vxpose.xlu0.b32.cont [12/16] 0.0, 128
        %189 = vxpose.xlu0.b32.cont [13/16] 0.0, 128
        %190 = vxpose.xlu0.b32.cont [14/16] 0.0, 128
        %191 = vxpose.xlu0.b32.cont [15/16] 0.0, 128
        %192 = vxpose.xlu0.b32.end [16/16] 0.0, 128
        %v193 = vpop.trf.xlu0
        %v194 = vpop.trf.xlu0
        %v195 = vpop.trf.xlu0
        %v196 = vpop.trf.xlu0
        %v197 = vpop.trf.xlu0
        %v198 = vpop.trf.xlu0
        %v199 = vpop.trf.xlu0
        %v200 = vpop.trf.xlu0
        %v201 = vpop.trf.xlu0
        %v202 = vpop.trf.xlu0
        %v203 = vpop.trf.xlu0
        %v204 = vpop.trf.xlu0
        %v205 = vpop.trf.xlu0
        %v206 = vpop.trf.xlu0
        %v207 = vpop.trf.xlu0
        %v208 = vpop.trf.xlu0
        %vm209 = vcmask 523264
        %210 = vst.msk [vmem:[%s167] sm:$0xff] %vm209, %v193
        %s211 = sand.u32 %s79, 1
        %s212 = scalar_lea.sflag [#allocation4], %s211
        %s213 = sand.u32 %s79, 1
        %s214 = smul.addr %s213, 8
        %s215 = scalar_lea.vmem [#allocation5], %s214
        // Predicated region
        $region29: #{tpu_custom_call.1} parent=23 // pred_check
          %p216 = pneg %p89
        $region30: #{tpu_custom_call.1} parent=23 // pred_check_branch
          %218 = sbr.rel (%p216) target = $region32
        $region31: #{tpu_custom_call.1} parent=23 // pred_region
          %220 = vsyncadd %s212, 0
          %s221 = sadd.s32 %s25, %s24
          %s222 = smul.addr %s23, 2
          %s223 = sadd.s32 %s221, %s222
          %s224 = smul.addr %s223, 8
          %s225 = scalar_lea.hbm %s1, %s224
          %s227 = sshll.u32 %s215, 4
          %s228 = int_to_ptr.vmem [resolvable:$true] %s227
          %s229 = sshll.u32 %s225, 4
          %s230 = int_to_ptr.hbm [resolvable:$true] %s229
          %232 = dma.vmem_to_hbm [thread:$0]  %s228, 128, %s230, %s212
        $region32: #{tpu_custom_call.1} parent=23 // pred_fallthru
          _
      $region24: #{tpu_custom_call.1} parent=5 // pred_fallthru
        _
      %p233 = scmp.le.s32.totalorder 2, %s13
      // Predicated region
      $region33: #{tpu_custom_call.1} parent=5 // pred_check
        %p234 = pneg %p233
      $region34: #{tpu_custom_call.1} parent=5 // pred_check_branch
        %236 = sbr.rel (%p234) target = $region36
      $region35: #{tpu_custom_call.1} parent=5 // pred_region
        %s237 = ssub.s32 %s13, 2
        // Predicated region
        $region37: #{tpu_custom_call.1} parent=35 // pred_check
          %p238 = pneg %p95
        $region38: #{tpu_custom_call.1} parent=35 // pred_check_branch
          %240 = sbr.rel (%p238) target = $region40
        $region39: #{tpu_custom_call.1} parent=35 // pred_region
          %s241 = sand.u32 %s80, 1
          %s242 = scalar_lea.sflag [#allocation4], %s241
          %s243 = sand.u32 %s80, 1
          %s244 = smul.addr %s243, 8
          %s245 = scalar_lea.vmem [#allocation5], %s244
          %247 = dma.done %s242, 128
        $region40: #{tpu_custom_call.1} parent=35 // pred_fallthru
          _
      $region36: #{tpu_custom_call.1} parent=5 // pred_fallthru
        _
    $region6: #{tpu_custom_call.1} parent=1 // loop_footer
      %s17 = sadd.s32 1, %s13
    $region7: #{tpu_custom_call.1} parent=1 // loop_footer_branch
      %12 = sbr.rel target = $region3
    $region8: #{tpu_custom_call.1} parent=1 // loop_exit
      _
    %248 = vsyncpa [#allocation3], 1
    %s249 = scalar_lea.sflag [#allocation3], 1
    %250 = vsyncpa %s249, 1
    %251 = vsyncpa [#allocation4], 1
    %s252 = scalar_lea.sflag [#allocation4], 1
    %253 = vsyncpa %s252, 1

</llo_original>
